<compile_context>
chip_gen: v6e
topology: v6e:2x2x1
jax: 0.10.0
libtpu: 0.0.40
codegen_flags: <defaults>
</compile_context>

<pallas_src>
import functools

import jax
import jax.numpy as jnp
from jax.experimental import pallas as pl
from jax.experimental.pallas import tpu as pltpu


def _round_up(n, m):
    return ((n + m - 1) // m) * m


def vae_fused_kernel(
    x_ref, eps_ref,
    w1_ref, b1_ref,
    wmlv_ref, bmlv_ref,
    w2_ref, b2_ref,
    wd_ref, bd_ref,
    wrb_ref,
    out_ref,
    *, latent_dim, out_pad, bf16_matmul,
):
    mm_dtype = jnp.bfloat16 if bf16_matmul else jnp.float32

    # ---- encoder: fc1 + relu (bf16 operands, f32 accumulate) ----
    x = x_ref[...].astype(mm_dtype)                           # (TB, D)
    h = jnp.dot(x, w1_ref[...], preferred_element_type=jnp.float32) + b1_ref[...]
    h = jnp.maximum(h, 0.0)                                   # (TB, 256) f32

    # ---- fused mu|logvar heads: single (256, 2L) matmul, slice lanes ----
    ml = jnp.dot(h.astype(mm_dtype), wmlv_ref[...],
                 preferred_element_type=jnp.float32) + bmlv_ref[...]
    mu = ml[:, :latent_dim]                                   # (TB, L) f32
    logvar = ml[:, latent_dim:]                               # (TB, L) f32

    # ---- reparameterize (f32) ----
    std = jnp.exp(0.5 * logvar)
    z = mu + eps_ref[...].astype(jnp.float32) * std           # (TB, L) f32

    # ---- decoder fc2 + relu ----
    h2 = jnp.dot(z.astype(mm_dtype), w2_ref[...],
                 preferred_element_type=jnp.float32) + b2_ref[...]
    h2 = jnp.maximum(h2, 0.0)                                 # (TB, 256) f32

    # ---- decoder output projection ----
    recon = jnp.dot(h2.astype(mm_dtype), wd_ref[...],
                    preferred_element_type=jnp.float32) + bd_ref[...]

    # ---- ranking head as f32 VPU mul + XLU lane-reduce (keeps matmul lanes
    #      clean and avoids the 1-lane masked extract) ----
    wr = wrb_ref[:, :latent_dim]                              # (1, L)
    br = wrb_ref[:, latent_dim:latent_dim + 1]                # (1, 1)
    score = jax.nn.sigmoid(jnp.sum(z * wr, axis=-1, keepdims=True) + br)

    # ---- single unmasked full-width (TB, 128k) store ----
    parts = [recon, mu, logvar, score]
    if out_pad:
        parts.append(jnp.zeros((recon.shape[0], out_pad), jnp.float32))
    out_ref[...] = jnp.concatenate(parts, axis=-1).astype(out_ref.dtype)


def _vae_forward_impl(x, eps, params, *, block_b=1024, bf16_matmul=True,
                      min_steps=2):
    B, input_dim = x.shape
    latent_dim = params["wmu"].shape[1]
    hidden = params["w1"].shape[1]

    # --- fuse / cast weights in the wrapper (tiny arrays, once per call) ---
    wdt = jnp.bfloat16 if bf16_matmul else jnp.float32
    w1 = params["w1"].astype(wdt)                                       # (D, 256)
    wmlv = jnp.concatenate([params["wmu"], params["wlv"]], 1).astype(wdt)  # (256, 2L)
    w2 = params["w2"].astype(wdt)                                       # (L, 256)
    wd = params["wd"].astype(wdt)                                       # (256, D)
    b1 = params["b1"].astype(jnp.float32)
    bmlv = jnp.concatenate([params["bmu"], params["blv"]], 1).astype(jnp.float32)
    b2 = params["b2"].astype(jnp.float32)
    bd = params["bd"].astype(jnp.float32)
    # ranking weight row + bias in one (1, L+1) resident array
    wrb = jnp.concatenate([params["wr"].T, params["br"]], 1).astype(jnp.float32)

    # --- batch tiling: big tiles, minimal padding, >=2 steps for v7x ---
    n_steps = max(pl.cdiv(B, block_b), 1)
    if min_steps > 1 and B >= 8 * min_steps:
        n_steps = max(n_steps, min_steps)
    tb = _round_up(pl.cdiv(B, n_steps), 8)
    grid = (pl.cdiv(B, tb),)            # ragged tail handled by partial blocks

    out_width = input_dim + 2 * latent_dim + 1
    out_width_padded = _round_up(out_width, 128)
    out_pad = out_width_padded - out_width

    def resident(arr):
        # Whole array, constant block index -> stays VMEM-resident across grid.
        return pl.BlockSpec(arr.shape, lambda i: (0, 0))

    kernel = functools.partial(
        vae_fused_kernel,
        latent_dim=latent_dim, out_pad=out_pad, bf16_matmul=bf16_matmul,
    )

    # VMEM footprint estimate (double-buffered lane-padded x/eps/out tiles +
    # f32 intermediates + weights), with 2x headroom, capped under v7x physical.
    est_vmem = 4 * tb * 128 * 2 * 3 + 4 * tb * hidden * 6 + (2 << 20)
    vmem_limit = int(min(max(2 * est_vmem, 32 << 20), 48 << 20))

    out = pl.pallas_call(
        kernel,
        out_shape=jax.ShapeDtypeStruct((B, out_width_padded), jnp.float32),
        grid=grid,
        in_specs=[
            pl.BlockSpec((tb, input_dim), lambda i: (i, 0)),    # x (native dtype)
            pl.BlockSpec((tb, latent_dim), lambda i: (i, 0)),   # eps
            resident(w1), resident(b1),
            resident(wmlv), resident(bmlv),
            resident(w2), resident(b2),
            resident(wd), resident(bd),
            resident(wrb),
        ],
        out_specs=pl.BlockSpec((tb, out_width_padded), lambda i: (i, 0)),
        compiler_params=pltpu.CompilerParams(
            dimension_semantics=("parallel",),
            vmem_limit_bytes=vmem_limit),
    )(x, eps, w1, b1, wmlv, bmlv, w2, b2, wd, bd, wrb)

    d, l = input_dim, latent_dim
    recon = out[:, :d]
    mu = out[:, d:d + l]
    logvar = out[:, d + l:d + 2 * l]
    score = out[:, d + 2 * l:d + 2 * l + 1]
    return score, recon, mu, logvar


vae_forward = jax.jit(
    _vae_forward_impl,
    static_argnames=("block_b", "bf16_matmul", "min_steps"))


def init_params(key, input_dim, latent_dim, hidden=256):
    """Deterministic synthetic init. Weights stored (in, out); y = x @ W + b."""
    def lin(k, fan_in, fan_out):
        kw, kb = jax.random.split(k)
        bound = 1.0 / jnp.sqrt(fan_in)
        w = jax.random.uniform(kw, (fan_in, fan_out), jnp.float32, -bound, bound)
        b = jax.random.uniform(kb, (1, fan_out), jnp.float32, -bound, bound)
        return w, b

    keys = jax.random.split(key, 6)
    w1, b1 = lin(keys[0], input_dim, hidden)
    wmu, bmu = lin(keys[1], hidden, latent_dim)
    wlv, blv = lin(keys[2], hidden, latent_dim)
    w2, b2 = lin(keys[3], latent_dim, hidden)
    wd, bd = lin(keys[4], hidden, input_dim)
    wr, br = lin(keys[5], latent_dim, 1)
    return dict(w1=w1, b1=b1, wmu=wmu, bmu=bmu, wlv=wlv, blv=blv,
                w2=w2, b2=b2, wd=wd, bd=bd, wr=wr, br=br)


def vae_forward_ref(x, eps, p, *, bf16_matmul=True):
    """Pure-JAX reference mirroring the kernel's precision
    (bf16 matmul operands, f32 accumulation, f32 elementwise / ranking head)."""
    mdt = jnp.bfloat16 if bf16_matmul else jnp.float32

    def mm(a, w):
        return jnp.dot(a.astype(mdt), w.astype(mdt),
                       preferred_element_type=jnp.float32)

    h = jnp.maximum(mm(x, p["w1"]) + p["b1"], 0.0)
    mu = mm(h, p["wmu"]) + p["bmu"]
    logvar = mm(h, p["wlv"]) + p["blv"]
    z = mu + eps * jnp.exp(0.5 * logvar)
    h2 = jnp.maximum(mm(z, p["w2"]) + p["b2"], 0.0)
    recon = mm(h2, p["wd"]) + p["bd"]
    score = jax.nn.sigmoid(jnp.sum(z * p["wr"].T, axis=-1, keepdims=True)
                           + p["br"])
    return score, recon, mu, logvar


if __name__ == "__main__":
    input_dim = 32
    latent_dim = 16
    hidden = 256  # fixed by the PyTorch module (nn.Linear(input_dim, 256))

    key = jax.random.PRNGKey(0)
    kx, keps, kp, kx2, keps2 = jax.random.split(key, 5)
    params = init_params(kp, input_dim, latent_dim, hidden)

    # case 1: batch multiple of 8 (single tile)
    x = jax.random.normal(kx, (8, input_dim), jnp.float32)
    eps = jax.random.normal(keps, (8, latent_dim), jnp.float32)
    # case 2: ragged batch (exercises 2 grid steps + partial last block)
    x2 = jax.random.normal(kx2, (20, input_dim), jnp.float32)
    eps2 = jax.random.normal(keps2, (20, latent_dim), jnp.float32)

    for xi, ei in ((x, eps), (x2, eps2)):
        outs = jax.block_until_ready(vae_forward(xi, ei, params))
        refs = vae_forward_ref(xi, ei, params)
        for got, ref in zip(outs, refs):
            assert got.shape == ref.shape, (got.shape, ref.shape)
            assert jnp.allclose(got, ref, atol=1e-2, rtol=1e-2), \
                float(jnp.max(jnp.abs(got - ref)))

    print("KERNEL_OK")
</pallas_src>

<mosaic_0001>
module attributes {stable_mosaic.version = 11 : i64} {
  func.func @vae_fused_kernel(%arg0: i32, %arg1: memref<8x32xf32, #tpu.memory_space<vmem>>, %arg2: memref<8x16xf32, #tpu.memory_space<vmem>>, %arg3: memref<32x256xbf16, #tpu.memory_space<vmem>>, %arg4: memref<1x256xf32, #tpu.memory_space<vmem>>, %arg5: memref<256x32xbf16, #tpu.memory_space<vmem>>, %arg6: memref<1x32xf32, #tpu.memory_space<vmem>>, %arg7: memref<16x256xbf16, #tpu.memory_space<vmem>>, %arg8: memref<1x256xf32, #tpu.memory_space<vmem>>, %arg9: memref<256x32xbf16, #tpu.memory_space<vmem>>, %arg10: memref<1x32xf32, #tpu.memory_space<vmem>>, %arg11: memref<1x17xf32, #tpu.memory_space<vmem>>, %arg12: memref<8x128xf32, #tpu.memory_space<vmem>>) attributes {dimension_semantics = [#tpu.dimension_semantics<parallel>], iteration_bounds = array<i64: 1>, scalar_prefetch = 0 : i64, scratch_operands = 0 : i64, tpu.core_type = #tpu.core_type<tc>, window_params = [{transform_indices = @transform_0, window_bounds = array<i64: 8, 32>}, {transform_indices = @transform_1, window_bounds = array<i64: 8, 16>}, {pipeline_mode = #tpu.pipeline_mode<synchronous>, transform_indices = @transform_2, window_bounds = array<i64: 32, 256>}, {pipeline_mode = #tpu.pipeline_mode<synchronous>, transform_indices = @transform_3, window_bounds = array<i64: 1, 256>}, {pipeline_mode = #tpu.pipeline_mode<synchronous>, transform_indices = @transform_4, window_bounds = array<i64: 256, 32>}, {pipeline_mode = #tpu.pipeline_mode<synchronous>, transform_indices = @transform_5, window_bounds = array<i64: 1, 32>}, {pipeline_mode = #tpu.pipeline_mode<synchronous>, transform_indices = @transform_6, window_bounds = array<i64: 16, 256>}, {pipeline_mode = #tpu.pipeline_mode<synchronous>, transform_indices = @transform_7, window_bounds = array<i64: 1, 256>}, {pipeline_mode = #tpu.pipeline_mode<synchronous>, transform_indices = @transform_8, window_bounds = array<i64: 256, 32>}, {pipeline_mode = #tpu.pipeline_mode<synchronous>, transform_indices = @transform_9, window_bounds = array<i64: 1, 32>}, {pipeline_mode = #tpu.pipeline_mode<synchronous>, transform_indices = @transform_10, window_bounds = array<i64: 1, 17>}, {transform_indices = @transform_11, window_bounds = array<i64: 8, 128>}]} {
    %c0 = arith.constant 0 : index
    %c0_0 = arith.constant 0 : index
    %0 = vector.load %arg1[%c0, %c0_0] : memref<8x32xf32, #tpu.memory_space<vmem>>, vector<8x32xf32>
    %1 = arith.truncf %0 : vector<8x32xf32> to vector<8x32xbf16>
    %c0_1 = arith.constant 0 : index
    %c0_2 = arith.constant 0 : index
    %2 = vector.load %arg3[%c0_1, %c0_2] : memref<32x256xbf16, #tpu.memory_space<vmem>>, vector<32x256xbf16>
    %cst = arith.constant dense<0.000000e+00> : vector<8x256xf32>
    %3 = tpu.matmul %1, %2, %cst {dimension_numbers = #tpu.dot_dimension_numbers<[1], [0], [0], [1], [0, 0, 1, 1], [], []>} : vector<8x32xbf16>, vector<32x256xbf16>, vector<8x256xf32> -> vector<8x256xf32>
    %c0_3 = arith.constant 0 : index
    %c0_4 = arith.constant 0 : index
    %4 = vector.load %arg4[%c0_3, %c0_4] : memref<1x256xf32, #tpu.memory_space<vmem>>, vector<1x256xf32>
    %5 = vector.broadcast %4 : vector<1x256xf32> to vector<8x256xf32>
    %6 = arith.addf %3, %5 : vector<8x256xf32>
    %cst_5 = arith.constant 0.000000e+00 : f32
    %7 = vector.broadcast %cst_5 : f32 to vector<8x256xf32>
    %8 = arith.maximumf %6, %7 : vector<8x256xf32>
    %9 = arith.truncf %8 : vector<8x256xf32> to vector<8x256xbf16>
    %c0_6 = arith.constant 0 : index
    %c0_7 = arith.constant 0 : index
    %10 = vector.load %arg5[%c0_6, %c0_7] : memref<256x32xbf16, #tpu.memory_space<vmem>>, vector<256x32xbf16>
    %cst_8 = arith.constant dense<0.000000e+00> : vector<8x32xf32>
    %11 = tpu.matmul %9, %10, %cst_8 {dimension_numbers = #tpu.dot_dimension_numbers<[1], [0], [0], [1], [0, 0, 1, 1], [], []>} : vector<8x256xbf16>, vector<256x32xbf16>, vector<8x32xf32> -> vector<8x32xf32>
    %c0_9 = arith.constant 0 : index
    %c0_10 = arith.constant 0 : index
    %12 = vector.load %arg6[%c0_9, %c0_10] : memref<1x32xf32, #tpu.memory_space<vmem>>, vector<1x32xf32>
    %13 = vector.broadcast %12 : vector<1x32xf32> to vector<8x32xf32>
    %14 = arith.addf %11, %13 : vector<8x32xf32>
    %15 = vector.extract_strided_slice %14 {offsets = [0, 0], sizes = [8, 16], strides = [1, 1]} : vector<8x32xf32> to vector<8x16xf32>
    %16 = vector.extract_strided_slice %14 {offsets = [0, 16], sizes = [8, 16], strides = [1, 1]} : vector<8x32xf32> to vector<8x16xf32>
    %cst_11 = arith.constant 5.000000e-01 : f32
    %17 = vector.broadcast %cst_11 : f32 to vector<8x16xf32>
    %18 = arith.mulf %17, %16 : vector<8x16xf32>
    %19 = math.exp %18 : vector<8x16xf32>
    %c0_12 = arith.constant 0 : index
    %c0_13 = arith.constant 0 : index
    %20 = vector.load %arg2[%c0_12, %c0_13] : memref<8x16xf32, #tpu.memory_space<vmem>>, vector<8x16xf32>
    %21 = arith.mulf %20, %19 : vector<8x16xf32>
    %22 = arith.addf %15, %21 : vector<8x16xf32>
    %23 = arith.truncf %22 : vector<8x16xf32> to vector<8x16xbf16>
    %c0_14 = arith.constant 0 : index
    %c0_15 = arith.constant 0 : index
    %24 = vector.load %arg7[%c0_14, %c0_15] : memref<16x256xbf16, #tpu.memory_space<vmem>>, vector<16x256xbf16>
    %cst_16 = arith.constant dense<0.000000e+00> : vector<8x256xf32>
    %25 = tpu.matmul %23, %24, %cst_16 {dimension_numbers = #tpu.dot_dimension_numbers<[1], [0], [0], [1], [0, 0, 1, 1], [], []>} : vector<8x16xbf16>, vector<16x256xbf16>, vector<8x256xf32> -> vector<8x256xf32>
    %c0_17 = arith.constant 0 : index
    %c0_18 = arith.constant 0 : index
    %26 = vector.load %arg8[%c0_17, %c0_18] : memref<1x256xf32, #tpu.memory_space<vmem>>, vector<1x256xf32>
    %27 = vector.broadcast %26 : vector<1x256xf32> to vector<8x256xf32>
    %28 = arith.addf %25, %27 : vector<8x256xf32>
    %cst_19 = arith.constant 0.000000e+00 : f32
    %29 = vector.broadcast %cst_19 : f32 to vector<8x256xf32>
    %30 = arith.maximumf %28, %29 : vector<8x256xf32>
    %31 = arith.truncf %30 : vector<8x256xf32> to vector<8x256xbf16>
    %c0_20 = arith.constant 0 : index
    %c0_21 = arith.constant 0 : index
    %32 = vector.load %arg9[%c0_20, %c0_21] : memref<256x32xbf16, #tpu.memory_space<vmem>>, vector<256x32xbf16>
    %cst_22 = arith.constant dense<0.000000e+00> : vector<8x32xf32>
    %33 = tpu.matmul %31, %32, %cst_22 {dimension_numbers = #tpu.dot_dimension_numbers<[1], [0], [0], [1], [0, 0, 1, 1], [], []>} : vector<8x256xbf16>, vector<256x32xbf16>, vector<8x32xf32> -> vector<8x32xf32>
    %c0_23 = arith.constant 0 : index
    %c0_24 = arith.constant 0 : index
    %34 = vector.load %arg10[%c0_23, %c0_24] : memref<1x32xf32, #tpu.memory_space<vmem>>, vector<1x32xf32>
    %35 = vector.broadcast %34 : vector<1x32xf32> to vector<8x32xf32>
    %36 = arith.addf %33, %35 : vector<8x32xf32>
    %c0_25 = arith.constant 0 : index
    %c0_26 = arith.constant 0 : index
    %37 = vector.load %arg11[%c0_25, %c0_26] : memref<1x17xf32, #tpu.memory_space<vmem>>, vector<1x16xf32>
    %c0_27 = arith.constant 0 : index
    %c16 = arith.constant 16 : index
    %38 = vector.load %arg11[%c0_27, %c16] : memref<1x17xf32, #tpu.memory_space<vmem>>, vector<1x1xf32>
    %39 = vector.broadcast %37 : vector<1x16xf32> to vector<8x16xf32>
    %40 = arith.mulf %22, %39 : vector<8x16xf32>
    %cst_28 = arith.constant dense<0.000000e+00> : vector<8xf32>
    %41 = vector.multi_reduction <add>, %40, %cst_28 [1] : vector<8x16xf32> to vector<8xf32>
    %42 = vector.shape_cast %41 : vector<8xf32> to vector<8x1xf32>
    %43 = vector.broadcast %38 : vector<1x1xf32> to vector<8x1xf32>
    %44 = arith.addf %42, %43 : vector<8x1xf32>
    %45 = arith.negf %44 : vector<8x1xf32>
    %46 = math.exp %45 : vector<8x1xf32>
    %cst_29 = arith.constant 1.000000e+00 : f32
    %47 = vector.broadcast %cst_29 : f32 to vector<8x1xf32>
    %48 = arith.addf %47, %46 : vector<8x1xf32>
    %49 = arith.divf %47, %48 : vector<8x1xf32>
    %cst_30 = arith.constant 0.000000e+00 : f32
    %50 = vector.broadcast %cst_30 : f32 to vector<8x63xf32>
    %51 = tpu.concatenate %36, %15, %16, %49, %50 in 1 : vector<8x32xf32>, vector<8x16xf32>, vector<8x16xf32>, vector<8x1xf32>, vector<8x63xf32> -> vector<8x128xf32>
    %c0_31 = arith.constant 0 : index
    %c0_32 = arith.constant 0 : index
    %52 = vector.load %arg12[%c0_31, %c0_32] : memref<8x128xf32, #tpu.memory_space<vmem>>, vector<8x128xf32>
    tpu.vector_store %arg12[%c0_31, %c0_32], %51 {strides = array<i32>} : memref<8x128xf32, #tpu.memory_space<vmem>>, vector<8x128xf32>,
    return
  }
  func.func @transform_0(%arg0: i32) -> (i32, i32) {
    %c0_i32 = arith.constant 0 : i32
    %c0_i32_0 = arith.constant 0 : i32
    return %arg0, %c0_i32 : i32, i32
  }
  func.func @transform_1(%arg0: i32) -> (i32, i32) {
    %c0_i32 = arith.constant 0 : i32
    %c0_i32_0 = arith.constant 0 : i32
    return %arg0, %c0_i32 : i32, i32
  }
  func.func @transform_2(%arg0: i32) -> (i32, i32) {
    %c0_i32 = arith.constant 0 : i32
    %c0_i32_0 = arith.constant 0 : i32
    %c0_i32_1 = arith.constant 0 : i32
    return %c0_i32, %c0_i32_0 : i32, i32
  }
  func.func @transform_3(%arg0: i32) -> (i32, i32) {
    %c0_i32 = arith.constant 0 : i32
    %c0_i32_0 = arith.constant 0 : i32
    %c0_i32_1 = arith.constant 0 : i32
    return %c0_i32, %c0_i32_0 : i32, i32
  }
  func.func @transform_4(%arg0: i32) -> (i32, i32) {
    %c0_i32 = arith.constant 0 : i32
    %c0_i32_0 = arith.constant 0 : i32
    %c0_i32_1 = arith.constant 0 : i32
    return %c0_i32, %c0_i32_0 : i32, i32
  }
  func.func @transform_5(%arg0: i32) -> (i32, i32) {
    %c0_i32 = arith.constant 0 : i32
    %c0_i32_0 = arith.constant 0 : i32
    %c0_i32_1 = arith.constant 0 : i32
    return %c0_i32, %c0_i32_0 : i32, i32
  }
  func.func @transform_6(%arg0: i32) -> (i32, i32) {
    %c0_i32 = arith.constant 0 : i32
    %c0_i32_0 = arith.constant 0 : i32
    %c0_i32_1 = arith.constant 0 : i32
    return %c0_i32, %c0_i32_0 : i32, i32
  }
  func.func @transform_7(%arg0: i32) -> (i32, i32) {
    %c0_i32 = arith.constant 0 : i32
    %c0_i32_0 = arith.constant 0 : i32
    %c0_i32_1 = arith.constant 0 : i32
    return %c0_i32, %c0_i32_0 : i32, i32
  }
  func.func @transform_8(%arg0: i32) -> (i32, i32) {
    %c0_i32 = arith.constant 0 : i32
    %c0_i32_0 = arith.constant 0 : i32
    %c0_i32_1 = arith.constant 0 : i32
    return %c0_i32, %c0_i32_0 : i32, i32
  }
  func.func @transform_9(%arg0: i32) -> (i32, i32) {
    %c0_i32 = arith.constant 0 : i32
    %c0_i32_0 = arith.constant 0 : i32
    %c0_i32_1 = arith.constant 0 : i32
    return %c0_i32, %c0_i32_0 : i32, i32
  }
  func.func @transform_10(%arg0: i32) -> (i32, i32) {
    %c0_i32 = arith.constant 0 : i32
    %c0_i32_0 = arith.constant 0 : i32
    %c0_i32_1 = arith.constant 0 : i32
    return %c0_i32, %c0_i32_0 : i32, i32
  }
  func.func @transform_11(%arg0: i32) -> (i32, i32) {
    %c0_i32 = arith.constant 0 : i32
    %c0_i32_0 = arith.constant 0 : i32
    return %arg0, %c0_i32 : i32, i32
  }
}

</mosaic_0001>

<llo_original>
// kernel: _vae_forward_impl.1
$region0: #{_vae_forward_impl.1}
  #allocation0 [shape = 'u32[]', space=smem, size = 0x4, offset = 0x4, fixed_abs, tag = 'smem constant byte address 0x4 - core index']
  #allocation1 [shape = 'u32[144,128]{1,0:T(1,128)}', space=vmem, size = 0x12000, scoped, tag = 'internal scratch']
  %s0 = inlined_call_operand.vmem [shape: f32[8,32], index: 0, kind: input, shape index: {}]
  %s1 = inlined_call_operand.vmem [shape: f32[8,16], index: 1, kind: input, shape index: {}]
  %s2 = inlined_call_operand.vmem [shape: bf16[32,256], index: 2, kind: input, shape index: {}]
  %s3 = inlined_call_operand.vmem [shape: f32[1,256], index: 3, kind: input, shape index: {}]
  %s4 = inlined_call_operand.vmem [shape: bf16[256,32], index: 4, kind: input, shape index: {}]
  %s5 = inlined_call_operand.vmem [shape: f32[1,32], index: 5, kind: input, shape index: {}]
  %s6 = inlined_call_operand.vmem [shape: bf16[16,256], index: 6, kind: input, shape index: {}]
  %s7 = inlined_call_operand.vmem [shape: f32[1,256], index: 7, kind: input, shape index: {}]
  %s8 = inlined_call_operand.vmem [shape: bf16[256,32], index: 8, kind: input, shape index: {}]
  %s9 = inlined_call_operand.vmem [shape: f32[1,32], index: 9, kind: input, shape index: {}]
  %s10 = inlined_call_operand.vmem [shape: f32[1,17], index: 10, kind: input, shape index: {}]
  %s11 = inlined_call_operand.vmem [shape: f32[8,128], index: 11, kind: output, shape index: {}]
  %s12 = sld [smem:[#allocation0]]
  $region54: #{_vae_forward_impl.1} parent=0
    _
  %s14 = ssub.s32 1, %s12
  %s15 = scalar_select 0, %s14, %s12
  // Predicated region
  $region2: #{_vae_forward_impl.1} parent=0 // pred_check
    _
  $region3: #{_vae_forward_impl.1} parent=0 // pred_check_branch
    %17 = sbr.rel (0) target = $region5
  $region4: #{_vae_forward_impl.1} parent=0 // pred_region
    _
  $region5: #{_vae_forward_impl.1} parent=0 // pred_fallthru
    _
  // Predicated region
  $region6: #{_vae_forward_impl.1} parent=0 // pred_check
    _
  $region7: #{_vae_forward_impl.1} parent=0 // pred_check_branch
    %19 = sbr.rel (0) target = $region9
  $region8: #{_vae_forward_impl.1} parent=0 // pred_region
    _
  $region9: #{_vae_forward_impl.1} parent=0 // pred_fallthru
    _
  // Predicated region
  $region10: #{_vae_forward_impl.1} parent=0 // pred_check
    _
  $region11: #{_vae_forward_impl.1} parent=0 // pred_check_branch
    %21 = sbr.rel (0) target = $region13
  $region12: #{_vae_forward_impl.1} parent=0 // pred_region
    _
  $region13: #{_vae_forward_impl.1} parent=0 // pred_fallthru
    _
  // Predicated region
  $region14: #{_vae_forward_impl.1} parent=0 // pred_check
    _
  $region15: #{_vae_forward_impl.1} parent=0 // pred_check_branch
    %23 = sbr.rel (0) target = $region17
  $region16: #{_vae_forward_impl.1} parent=0 // pred_region
    _
  $region17: #{_vae_forward_impl.1} parent=0 // pred_fallthru
    _
  // Predicated region
  $region18: #{_vae_forward_impl.1} parent=0 // pred_check
    _
  $region19: #{_vae_forward_impl.1} parent=0 // pred_check_branch
    %25 = sbr.rel (0) target = $region21
  $region20: #{_vae_forward_impl.1} parent=0 // pred_region
    _
  $region21: #{_vae_forward_impl.1} parent=0 // pred_fallthru
    _
  // Predicated region
  $region22: #{_vae_forward_impl.1} parent=0 // pred_check
    _
  $region23: #{_vae_forward_impl.1} parent=0 // pred_check_branch
    %27 = sbr.rel (0) target = $region25
  $region24: #{_vae_forward_impl.1} parent=0 // pred_region
    _
  $region25: #{_vae_forward_impl.1} parent=0 // pred_fallthru
    _
  // Predicated region
  $region26: #{_vae_forward_impl.1} parent=0 // pred_check
    _
  $region27: #{_vae_forward_impl.1} parent=0 // pred_check_branch
    %29 = sbr.rel (0) target = $region29
  $region28: #{_vae_forward_impl.1} parent=0 // pred_region
    _
  $region29: #{_vae_forward_impl.1} parent=0 // pred_fallthru
    _
  // Predicated region
  $region30: #{_vae_forward_impl.1} parent=0 // pred_check
    _
  $region31: #{_vae_forward_impl.1} parent=0 // pred_check_branch
    %31 = sbr.rel (0) target = $region33
  $region32: #{_vae_forward_impl.1} parent=0 // pred_region
    _
  $region33: #{_vae_forward_impl.1} parent=0 // pred_fallthru
    _
  // Predicated region
  $region34: #{_vae_forward_impl.1} parent=0 // pred_check
    _
  $region35: #{_vae_forward_impl.1} parent=0 // pred_check_branch
    %33 = sbr.rel (0) target = $region37
  $region36: #{_vae_forward_impl.1} parent=0 // pred_region
    _
  $region37: #{_vae_forward_impl.1} parent=0 // pred_fallthru
    _
  // Predicated region
  $region38: #{_vae_forward_impl.1} parent=0 // pred_check
    _
  $region39: #{_vae_forward_impl.1} parent=0 // pred_check_branch
    %35 = sbr.rel (0) target = $region41
  $region40: #{_vae_forward_impl.1} parent=0 // pred_region
    _
  $region41: #{_vae_forward_impl.1} parent=0 // pred_fallthru
    _
  // Predicated region
  $region42: #{_vae_forward_impl.1} parent=0 // pred_check
    _
  $region43: #{_vae_forward_impl.1} parent=0 // pred_check_branch
    %37 = sbr.rel (0) target = $region45
  $region44: #{_vae_forward_impl.1} parent=0 // pred_region
    _
  $region45: #{_vae_forward_impl.1} parent=0 // pred_fallthru
    _
  %v39 = vld [vmem:[%s0] sm:$0xff]
  %v40 = vpack.c.bf16 %v39, %v39
  %v41 = vld [vmem:[%s2] sm:$0xff]
  %v42 = vld [vmem:[%s2 + $0x8] sm:$0xff]
  %v43 = vld [vmem:[%s2 + $0x10] sm:$0xff]
  %v44 = vld [vmem:[%s2 + $0x18] sm:$0xff]
  %v45 = vld [vmem:[%s3] sm:$0x3]
  %v47 = vlaneseq
  %v48 = vshrl.u32 %v47, 7
  %v49 = vsub.s32 0, %v48
  %v50 = vrot.slane %v45, %v49
  %v51 = vlaneseq
  %v52 = vshrl.u32 %v51, 7
  %v53 = vsub.s32 1, %v52
  %v54 = vrot.slane %v45, %v53
  %v61 = vunpack.c.l.b16 %v41
  %v62 = vunpack.c.h.b16 %v41
  %v63 = vunpack.c.l.b16 %v42
  %v64 = vunpack.c.h.b16 %v42
  %v65 = vunpack.c.l.b16 %v43
  %v66 = vunpack.c.h.b16 %v43
  %v67 = vunpack.c.l.b16 %v44
  %v68 = vunpack.c.h.b16 %v44
  %v69 = vpack.c.b16 %v63, %v61
  %v70 = vpack.c.b16 %v64, %v62
  %v71 = vpack.c.b16 %v67, %v65
  %v72 = vpack.c.b16 %v68, %v66
  %vm77 = vcmask 261120
  %v79 = vsel %vm77, %v40, 0
  %81 = vmatprep.subr.bf16.mxu0 0
  %82 = vmatpush1.bf16.msra.mxu0 0
  %83 = vmatprep.subr.bf16.mxu0 0
  %84 = vmatpush1.bf16.msra.mxu0 0
  %85 = vmatprep.subr.bf16.mxu0 0
  %86 = vmatpush1.bf16.msra.mxu0 0
  %87 = vmatprep.subr.bf16.mxu0 0
  %88 = vmatpush1.bf16.msra.mxu0 0
  %89 = vmatprep.subr.bf16.mxu0 0
  %90 = vmatpush1.bf16.msra.mxu0 0
  %91 = vmatprep.subr.bf16.mxu0 0
  %92 = vmatpush1.bf16.msra.mxu0 0
  %93 = vmatprep.subr.bf16.mxu0 %v72
  %94 = vmatpush1.bf16.msra.mxu0 %v71
  %95 = vmatprep.subr.bf16.mxu0 %v70
  %96 = vmatpush1.bf16.msra.mxu0 %v69
  %97 = vmatprep.subr.bf16.mxu0 0
  %98 = vmatpush2.bf16.msra.mxu0 0
  %99 = vmatprep.subr.bf16.mxu0 0
  %100 = vmatpush2.bf16.msra.mxu0 0
  %101 = vmatprep.subr.bf16.mxu0 0
  %102 = vmatpush2.bf16.msra.mxu0 0
  %103 = vmatprep.subr.bf16.mxu0 0
  %104 = vmatpush2.bf16.msra.mxu0 0
  %105 = vmatprep.subr.bf16.mxu0 0
  %106 = vmatpush2.bf16.msra.mxu0 0
  %107 = vmatprep.subr.bf16.mxu0 0
  %108 = vmatpush2.bf16.msra.mxu0 0
  %109 = vmatprep.subr.bf16.mxu0 0
  %110 = vmatpush2.bf16.msra.mxu0 0
  %111 = vmatprep.subr.bf16.mxu0 0
  %112 = vmatpush2.bf16.msra.mxu0 0
  %113 = vmatprep.mubr.bf16.mxu0 0
  %114 = vmatmul.mubr.bf16.gmra.mxu0 %v79
  %v115 = vpop.f32.mrf.mxu0
  %v116 = vadd.f32 %v50, %v115
  %v117 = vpop.f32.mrf.mxu0
  %v118 = vadd.f32 %v54, %v117
  %v119 = vpop.f32.mrf.mxu0
  %v120 = vpop.f32.mrf.mxu0
  %121 = vdwg.mxu0
  %v122 = vmax.f32 %v116, 0.0
  %v123 = vmax.f32 %v118, 0.0
  %v124 = vpack.c.bf16 %v122, %v122
  %v125 = vpack.c.bf16 %v123, %v123
  %v126 = vld [vmem:[%s4] sm:$0xf]
  %v127 = vld [vmem:[%s4 + $0x4] sm:$0xf]
  %v128 = vld [vmem:[%s4 + $0x8] sm:$0xf]
  %v129 = vld [vmem:[%s4 + $0xc] sm:$0xf]
  %v130 = vld [vmem:[%s4 + $0x10] sm:$0xf]
  %v131 = vld [vmem:[%s4 + $0x14] sm:$0xf]
  %v132 = vld [vmem:[%s4 + $0x18] sm:$0xf]
  %v133 = vld [vmem:[%s4 + $0x1c] sm:$0xf]
  %v134 = vld [vmem:[%s4 + $0x20] sm:$0xf]
  %v135 = vld [vmem:[%s4 + $0x24] sm:$0xf]
  %v136 = vld [vmem:[%s4 + $0x28] sm:$0xf]
  %v137 = vld [vmem:[%s4 + $0x2c] sm:$0xf]
  %v138 = vld [vmem:[%s4 + $0x30] sm:$0xf]
  %v139 = vld [vmem:[%s4 + $0x34] sm:$0xf]
  %v140 = vld [vmem:[%s4 + $0x38] sm:$0xf]
  %v141 = vld [vmem:[%s4 + $0x3c] sm:$0xf]
  %v142 = vld [vmem:[%s4 + $0x40] sm:$0xf]
  %v143 = vld [vmem:[%s4 + $0x44] sm:$0xf]
  %v144 = vld [vmem:[%s4 + $0x48] sm:$0xf]
  %v145 = vld [vmem:[%s4 + $0x4c] sm:$0xf]
  %v146 = vld [vmem:[%s4 + $0x50] sm:$0xf]
  %v147 = vld [vmem:[%s4 + $0x54] sm:$0xf]
  %v148 = vld [vmem:[%s4 + $0x58] sm:$0xf]
  %v149 = vld [vmem:[%s4 + $0x5c] sm:$0xf]
  %v150 = vld [vmem:[%s4 + $0x60] sm:$0xf]
  %v151 = vld [vmem:[%s4 + $0x64] sm:$0xf]
  %v152 = vld [vmem:[%s4 + $0x68] sm:$0xf]
  %v153 = vld [vmem:[%s4 + $0x6c] sm:$0xf]
  %v154 = vld [vmem:[%s4 + $0x70] sm:$0xf]
  %v155 = vld [vmem:[%s4 + $0x74] sm:$0xf]
  %v156 = vld [vmem:[%s4 + $0x78] sm:$0xf]
  %v157 = vld [vmem:[%s4 + $0x7c] sm:$0xf]
  %v158 = vld [vmem:[%s5] sm:$0x1]
  %v160 = vlaneseq
  %v161 = vshrl.u32 %v160, 7
  %v162 = vsub.s32 0, %v161
  %v163 = vrot.slane %v158, %v162
  %v197 = vunpack.c.l.b16 %v126
  %v198 = vunpack.c.l.b16 %v127
  %v199 = vunpack.c.l.b16 %v128
  %v200 = vunpack.c.l.b16 %v129
  %v201 = vunpack.c.l.b16 %v130
  %v202 = vunpack.c.l.b16 %v131
  %v203 = vunpack.c.l.b16 %v132
  %v204 = vunpack.c.l.b16 %v133
  %v205 = vunpack.c.l.b16 %v134
  %v206 = vunpack.c.l.b16 %v135
  %v207 = vunpack.c.l.b16 %v136
  %v208 = vunpack.c.l.b16 %v137
  %v209 = vunpack.c.l.b16 %v138
  %v210 = vunpack.c.l.b16 %v139
  %v211 = vunpack.c.l.b16 %v140
  %v212 = vunpack.c.l.b16 %v141
  %v213 = vunpack.c.l.b16 %v142
  %v214 = vunpack.c.l.b16 %v143
  %v215 = vunpack.c.l.b16 %v144
  %v216 = vunpack.c.l.b16 %v145
  %v217 = vunpack.c.l.b16 %v146
  %v218 = vunpack.c.l.b16 %v147
  %v219 = vunpack.c.l.b16 %v148
  %v220 = vunpack.c.l.b16 %v149
  %v221 = vunpack.c.l.b16 %v150
  %v222 = vunpack.c.l.b16 %v151
  %v223 = vunpack.c.l.b16 %v152
  %v224 = vunpack.c.l.b16 %v153
  %v225 = vunpack.c.l.b16 %v154
  %v226 = vunpack.c.l.b16 %v155
  %v227 = vunpack.c.l.b16 %v156
  %v228 = vunpack.c.l.b16 %v157
  %v229 = vpack.c.b16 %v198, %v197
  %v230 = vpack.c.b16 %v200, %v199
  %v231 = vpack.c.b16 %v202, %v201
  %v232 = vpack.c.b16 %v204, %v203
  %v233 = vpack.c.b16 %v206, %v205
  %v234 = vpack.c.b16 %v208, %v207
  %v235 = vpack.c.b16 %v210, %v209
  %v236 = vpack.c.b16 %v212, %v211
  %v237 = vpack.c.b16 %v214, %v213
  %v238 = vpack.c.b16 %v216, %v215
  %v239 = vpack.c.b16 %v218, %v217
  %v240 = vpack.c.b16 %v220, %v219
  %v241 = vpack.c.b16 %v222, %v221
  %v242 = vpack.c.b16 %v224, %v223
  %v243 = vpack.c.b16 %v226, %v225
  %v244 = vpack.c.b16 %v228, %v227
  %261 = vmatprep.subr.bf16.mxu0 0
  %262 = vmatpush1.bf16.msra.mxu0 %v236
  %263 = vmatprep.subr.bf16.mxu0 0
  %264 = vmatpush1.bf16.msra.mxu0 %v235
  %265 = vmatprep.subr.bf16.mxu0 0
  %266 = vmatpush1.bf16.msra.mxu0 %v234
  %267 = vmatprep.subr.bf16.mxu0 0
  %268 = vmatpush1.bf16.msra.mxu0 %v233
  %269 = vmatprep.subr.bf16.mxu0 0
  %270 = vmatpush1.bf16.msra.mxu0 %v232
  %271 = vmatprep.subr.bf16.mxu0 0
  %272 = vmatpush1.bf16.msra.mxu0 %v231
  %273 = vmatprep.subr.bf16.mxu0 0
  %274 = vmatpush1.bf16.msra.mxu0 %v230
  %275 = vmatprep.subr.bf16.mxu0 0
  %276 = vmatpush1.bf16.msra.mxu0 %v229
  %277 = vmatprep.subr.bf16.mxu0 0
  %278 = vmatpush2.bf16.msra.mxu0 %v244
  %279 = vmatprep.subr.bf16.mxu0 0
  %280 = vmatpush2.bf16.msra.mxu0 %v243
  %281 = vmatprep.subr.bf16.mxu0 0
  %282 = vmatpush2.bf16.msra.mxu0 %v242
  %283 = vmatprep.subr.bf16.mxu0 0
  %284 = vmatpush2.bf16.msra.mxu0 %v241
  %285 = vmatprep.subr.bf16.mxu0 0
  %286 = vmatpush2.bf16.msra.mxu0 %v240
  %287 = vmatprep.subr.bf16.mxu0 0
  %288 = vmatpush2.bf16.msra.mxu0 %v239
  %289 = vmatprep.subr.bf16.mxu0 0
  %290 = vmatpush2.bf16.msra.mxu0 %v238
  %291 = vmatprep.subr.bf16.mxu0 0
  %292 = vmatpush2.bf16.msra.mxu0 %v237
  %293 = vmatprep.mubr.bf16.mxu0 %v125
  %294 = vmatmul.mubr.bf16.gmra.mxu0 %v124
  %v295 = vpop.f32.mrf.mxu0
  %v296 = vadd.f32 %v163, %v295
  %v297 = vpop.f32.mrf.mxu0
  %v298 = vpop.f32.mrf.mxu0
  %v299 = vpop.f32.mrf.mxu0
  %300 = vdwg.mxu0
  %v301 = vmul.f32 %v296, 0.5
  %v302 = vmul.f32 %v301, 1.442695
  %v303 = vpow.pop %v302
  %v304 = vld [vmem:[%s1] sm:$0xff]
  %306 = vrot.lane.b32.xlu0 %v303, 112
  %v307 = vpop.permute.xlu0 %306
  %v309 = vmul.f32 %v304, %v307
  %v310 = vadd.f32 %v296, %v309
  %v311 = vpack.c.bf16 %v310, %v310
  %v312 = vld [vmem:[%s6] sm:$0xff]
  %v313 = vld [vmem:[%s6 + $0x8] sm:$0xff]
  %v314 = vld [vmem:[%s7] sm:$0x3]
  %v316 = vlaneseq
  %v317 = vshrl.u32 %v316, 7
  %v318 = vsub.s32 0, %v317
  %v319 = vrot.slane %v314, %v318
  %v320 = vlaneseq
  %v321 = vshrl.u32 %v320, 7
  %v322 = vsub.s32 1, %v321
  %v323 = vrot.slane %v314, %v322
  %v328 = vunpack.c.l.b16 %v312
  %v329 = vunpack.c.h.b16 %v312
  %v330 = vunpack.c.l.b16 %v313
  %v331 = vunpack.c.h.b16 %v313
  %v332 = vpack.c.b16 %v330, %v328
  %v333 = vpack.c.b16 %v331, %v329
  %vm336 = vcmask 130048
  %v338 = vsel %vm336, %v311, 0
  %340 = vmatprep.subr.bf16.mxu0 0
  %341 = vmatpush1.bf16.msra.mxu0 0
  %342 = vmatprep.subr.bf16.mxu0 0
  %343 = vmatpush1.bf16.msra.mxu0 0
  %344 = vmatprep.subr.bf16.mxu0 0
  %345 = vmatpush1.bf16.msra.mxu0 0
  %346 = vmatprep.subr.bf16.mxu0 0
  %347 = vmatpush1.bf16.msra.mxu0 0
  %348 = vmatprep.subr.bf16.mxu0 0
  %349 = vmatpush1.bf16.msra.mxu0 0
  %350 = vmatprep.subr.bf16.mxu0 0
  %351 = vmatpush1.bf16.msra.mxu0 0
  %352 = vmatprep.subr.bf16.mxu0 0
  %353 = vmatpush1.bf16.msra.mxu0 0
  %354 = vmatprep.subr.bf16.mxu0 %v333
  %355 = vmatpush1.bf16.msra.mxu0 %v332
  %356 = vmatprep.subr.bf16.mxu0 0
  %357 = vmatpush2.bf16.msra.mxu0 0
  %358 = vmatprep.subr.bf16.mxu0 0
  %359 = vmatpush2.bf16.msra.mxu0 0
  %360 = vmatprep.subr.bf16.mxu0 0
  %361 = vmatpush2.bf16.msra.mxu0 0
  %362 = vmatprep.subr.bf16.mxu0 0
  %363 = vmatpush2.bf16.msra.mxu0 0
  %364 = vmatprep.subr.bf16.mxu0 0
  %365 = vmatpush2.bf16.msra.mxu0 0
  %366 = vmatprep.subr.bf16.mxu0 0
  %367 = vmatpush2.bf16.msra.mxu0 0
  %368 = vmatprep.subr.bf16.mxu0 0
  %369 = vmatpush2.bf16.msra.mxu0 0
  %370 = vmatprep.subr.bf16.mxu0 0
  %371 = vmatpush2.bf16.msra.mxu0 0
  %372 = vmatprep.mubr.bf16.mxu0 0
  %373 = vmatmul.mubr.bf16.gmra.mxu0 %v338
  %v374 = vpop.f32.mrf.mxu0
  %v375 = vadd.f32 %v319, %v374
  %v376 = vpop.f32.mrf.mxu0
  %v377 = vadd.f32 %v323, %v376
  %v378 = vpop.f32.mrf.mxu0
  %v379 = vpop.f32.mrf.mxu0
  %380 = vdwg.mxu0
  %v381 = vmax.f32 %v375, 0.0
  %v382 = vmax.f32 %v377, 0.0
  %v383 = vpack.c.bf16 %v381, %v381
  %v384 = vpack.c.bf16 %v382, %v382
  %v385 = vld [vmem:[%s8] sm:$0xf]
  %v386 = vld [vmem:[%s8 + $0x4] sm:$0xf]
  %v387 = vld [vmem:[%s8 + $0x8] sm:$0xf]
  %v388 = vld [vmem:[%s8 + $0xc] sm:$0xf]
  %v389 = vld [vmem:[%s8 + $0x10] sm:$0xf]
  %v390 = vld [vmem:[%s8 + $0x14] sm:$0xf]
  %v391 = vld [vmem:[%s8 + $0x18] sm:$0xf]
  %v392 = vld [vmem:[%s8 + $0x1c] sm:$0xf]
  %v393 = vld [vmem:[%s8 + $0x20] sm:$0xf]
  %v394 = vld [vmem:[%s8 + $0x24] sm:$0xf]
  %v395 = vld [vmem:[%s8 + $0x28] sm:$0xf]
  %v396 = vld [vmem:[%s8 + $0x2c] sm:$0xf]
  %v397 = vld [vmem:[%s8 + $0x30] sm:$0xf]
  %v398 = vld [vmem:[%s8 + $0x34] sm:$0xf]
  %v399 = vld [vmem:[%s8 + $0x38] sm:$0xf]
  %v400 = vld [vmem:[%s8 + $0x3c] sm:$0xf]
  %v401 = vld [vmem:[%s8 + $0x40] sm:$0xf]
  %v402 = vld [vmem:[%s8 + $0x44] sm:$0xf]
  %v403 = vld [vmem:[%s8 + $0x48] sm:$0xf]
  %v404 = vld [vmem:[%s8 + $0x4c] sm:$0xf]
  %v405 = vld [vmem:[%s8 + $0x50] sm:$0xf]
  %v406 = vld [vmem:[%s8 + $0x54] sm:$0xf]
  %v407 = vld [vmem:[%s8 + $0x58] sm:$0xf]
  %v408 = vld [vmem:[%s8 + $0x5c] sm:$0xf]
  %v409 = vld [vmem:[%s8 + $0x60] sm:$0xf]
  %v410 = vld [vmem:[%s8 + $0x64] sm:$0xf]
  %v411 = vld [vmem:[%s8 + $0x68] sm:$0xf]
  %v412 = vld [vmem:[%s8 + $0x6c] sm:$0xf]
  %v413 = vld [vmem:[%s8 + $0x70] sm:$0xf]
  %v414 = vld [vmem:[%s8 + $0x74] sm:$0xf]
  %v415 = vld [vmem:[%s8 + $0x78] sm:$0xf]
  %v416 = vld [vmem:[%s8 + $0x7c] sm:$0xf]
  %v417 = vld [vmem:[%s9] sm:$0x1]
  %v419 = vlaneseq
  %v420 = vshrl.u32 %v419, 7
  %v421 = vsub.s32 0, %v420
  %v422 = vrot.slane %v417, %v421
  %v456 = vunpack.c.l.b16 %v385
  %v457 = vunpack.c.l.b16 %v386
  %v458 = vunpack.c.l.b16 %v387
  %v459 = vunpack.c.l.b16 %v388
  %v460 = vunpack.c.l.b16 %v389
  %v461 = vunpack.c.l.b16 %v390
  %v462 = vunpack.c.l.b16 %v391
  %v463 = vunpack.c.l.b16 %v392
  %v464 = vunpack.c.l.b16 %v393
  %v465 = vunpack.c.l.b16 %v394
  %v466 = vunpack.c.l.b16 %v395
  %v467 = vunpack.c.l.b16 %v396
  %v468 = vunpack.c.l.b16 %v397
  %v469 = vunpack.c.l.b16 %v398
  %v470 = vunpack.c.l.b16 %v399
  %v471 = vunpack.c.l.b16 %v400
  %v472 = vunpack.c.l.b16 %v401
  %v473 = vunpack.c.l.b16 %v402
  %v474 = vunpack.c.l.b16 %v403
  %v475 = vunpack.c.l.b16 %v404
  %v476 = vunpack.c.l.b16 %v405
  %v477 = vunpack.c.l.b16 %v406
  %v478 = vunpack.c.l.b16 %v407
  %v479 = vunpack.c.l.b16 %v408
  %v480 = vunpack.c.l.b16 %v409
  %v481 = vunpack.c.l.b16 %v410
  %v482 = vunpack.c.l.b16 %v411
  %v483 = vunpack.c.l.b16 %v412
  %v484 = vunpack.c.l.b16 %v413
  %v485 = vunpack.c.l.b16 %v414
  %v486 = vunpack.c.l.b16 %v415
  %v487 = vunpack.c.l.b16 %v416
  %v488 = vpack.c.b16 %v457, %v456
  %v489 = vpack.c.b16 %v459, %v458
  %v490 = vpack.c.b16 %v461, %v460
  %v491 = vpack.c.b16 %v463, %v462
  %v492 = vpack.c.b16 %v465, %v464
  %v493 = vpack.c.b16 %v467, %v466
  %v494 = vpack.c.b16 %v469, %v468
  %v495 = vpack.c.b16 %v471, %v470
  %v496 = vpack.c.b16 %v473, %v472
  %v497 = vpack.c.b16 %v475, %v474
  %v498 = vpack.c.b16 %v477, %v476
  %v499 = vpack.c.b16 %v479, %v478
  %v500 = vpack.c.b16 %v481, %v480
  %v501 = vpack.c.b16 %v483, %v482
  %v502 = vpack.c.b16 %v485, %v484
  %v503 = vpack.c.b16 %v487, %v486
  %520 = vmatprep.subr.bf16.mxu0 0
  %521 = vmatpush1.bf16.msra.mxu0 %v495
  %522 = vmatprep.subr.bf16.mxu0 0
  %523 = vmatpush1.bf16.msra.mxu0 %v494
  %524 = vmatprep.subr.bf16.mxu0 0
  %525 = vmatpush1.bf16.msra.mxu0 %v493
  %526 = vmatprep.subr.bf16.mxu0 0
  %527 = vmatpush1.bf16.msra.mxu0 %v492
  %528 = vmatprep.subr.bf16.mxu0 0
  %529 = vmatpush1.bf16.msra.mxu0 %v491
  %530 = vmatprep.subr.bf16.mxu0 0
  %531 = vmatpush1.bf16.msra.mxu0 %v490
  %532 = vmatprep.subr.bf16.mxu0 0
  %533 = vmatpush1.bf16.msra.mxu0 %v489
  %534 = vmatprep.subr.bf16.mxu0 0
  %535 = vmatpush1.bf16.msra.mxu0 %v488
  %536 = vmatprep.subr.bf16.mxu0 0
  %537 = vmatpush2.bf16.msra.mxu0 %v503
  %538 = vmatprep.subr.bf16.mxu0 0
  %539 = vmatpush2.bf16.msra.mxu0 %v502
  %540 = vmatprep.subr.bf16.mxu0 0
  %541 = vmatpush2.bf16.msra.mxu0 %v501
  %542 = vmatprep.subr.bf16.mxu0 0
  %543 = vmatpush2.bf16.msra.mxu0 %v500
  %544 = vmatprep.subr.bf16.mxu0 0
  %545 = vmatpush2.bf16.msra.mxu0 %v499
  %546 = vmatprep.subr.bf16.mxu0 0
  %547 = vmatpush2.bf16.msra.mxu0 %v498
  %548 = vmatprep.subr.bf16.mxu0 0
  %549 = vmatpush2.bf16.msra.mxu0 %v497
  %550 = vmatprep.subr.bf16.mxu0 0
  %551 = vmatpush2.bf16.msra.mxu0 %v496
  %552 = vmatprep.mubr.bf16.mxu0 %v384
  %553 = vmatmul.mubr.bf16.gmra.mxu0 %v383
  %v554 = vpop.f32.mrf.mxu0
  %v555 = vadd.f32 %v422, %v554
  %v556 = vpop.f32.mrf.mxu0
  %v557 = vpop.f32.mrf.mxu0
  %v558 = vpop.f32.mrf.mxu0
  %559 = vdwg.mxu0
  %v560 = vld [vmem:[%s10] sm:$0x1]
  %v562 = vlaneseq
  %v563 = vshrl.u32 %v562, 7
  %v564 = vsub.s32 0, %v563
  %v565 = vrot.slane %v560, %v564
  %v567 = vmul.f32 %v310, %v565
  %v568 = vsel %vm336, %v567, 0.0
  %569 = vadd.xlane.f32.xlu0 %v568
  %v570 = vpop.xlane.xlu0 %569
  %v571 = vadd.f32 %v570, %v565
  %v572 = vxor.u32 %v571, 2147483648
  %v573 = vmul.f32 %v572, 1.442695
  %v574 = vpow.pop %v573
  %v575 = vadd.f32 %v574, 1.0
  %v576 = vrcp.pop %v575
  %v577 = vmul.f32 1.0, %v576
  %579 = vrot.lane.b32.xlu0 %v296, 32
  %v580 = vpop.permute.xlu0 %579
  %583 = vrot.lane.b32.xlu0 %v577, 48
  %v584 = vpop.permute.xlu0 %583
  %v586 = vsel %vm77, %v555, %v580
  %vm587 = vcmask 392192
  %v588 = vsel %vm587, %v586, %v580
  %vm589 = vcmask 523264
  %v590 = vsel %vm589, %v588, %v584
  %vm591 = vcmask 531456
  %v592 = vsel %vm591, %v590, 0.0
  %593 = vst [vmem:[%s11] sm:$0xff] %v592
  // Predicated region
  $region46: #{_vae_forward_impl.1} parent=0 // pred_check
    _
  $region47: #{_vae_forward_impl.1} parent=0 // pred_check_branch
    %595 = sbr.rel (0) target = $region49
  $region48: #{_vae_forward_impl.1} parent=0 // pred_region
    _
  $region49: #{_vae_forward_impl.1} parent=0 // pred_fallthru
    _
  // Predicated region
  $region50: #{_vae_forward_impl.1} parent=0 // pred_check
    _
  $region51: #{_vae_forward_impl.1} parent=0 // pred_check_branch
    %597 = sbr.rel (0) target = $region53
  $region52: #{_vae_forward_impl.1} parent=0 // pred_region
    _
  $region53: #{_vae_forward_impl.1} parent=0 // pred_fallthru
    _

</llo_original>
